<compile_context>
chip_gen: v7x
topology: tpu7x:2x2x1
jax: 0.10.0
libtpu: 0.0.40
codegen_flags: <defaults>
</compile_context>

<pallas_src>
import jax
import jax.numpy as jnp
from jax.experimental import pallas as pl
from jax.experimental.pallas import tpu as pltpu


def _squeeze_copy_kernel(x_hbm, o_hbm, sem):
    # Single whole-array HBM -> HBM DMA; no VMEM staging, no grid.
    cp = pltpu.make_async_copy(x_hbm, o_hbm, sem)
    cp.start()
    cp.wait()


def squeeze_extractor(x: jax.Array) -> jax.Array:
    """Pallas equivalent of SqueezeExtractor.forward: (N, C, 1, 1) -> (N, C)."""
    n, c, h, w = x.shape
    assert h == 1 and w == 1, "SqueezeExtractor expects trailing spatial dims of size 1"

    # Metadata-only squeeze in the wrapper: zero data movement.
    x2 = jnp.reshape(x, (n, c))

    itemsize = jnp.dtype(x.dtype).itemsize
    return pl.pallas_call(
        _squeeze_copy_kernel,
        out_shape=jax.ShapeDtypeStruct((n, c), x.dtype),
        in_specs=[pl.BlockSpec(memory_space=pl.ANY)],
        out_specs=pl.BlockSpec(memory_space=pl.ANY),
        scratch_shapes=[pltpu.SemaphoreType.DMA(())],
        cost_estimate=pl.CostEstimate(
            flops=0, transcendentals=0, bytes_accessed=2 * n * c * itemsize),
    )(x2)


if __name__ == "__main__":
    key = jax.random.PRNGKey(0)

    # Small shape consistent with the module: (batch=2, channels=4, 1, 1),
    # e.g. the output of a globally-pooled feature extractor.
    x = jax.random.normal(key, (2, 4, 1, 1), dtype=jnp.float32)
    out = jax.block_until_ready(squeeze_extractor(x))
    ref = jnp.squeeze(x, axis=(2, 3))
    assert out.shape == (2, 4), out.shape
    assert out.dtype == x.dtype
    assert jnp.array_equal(out, ref)

    # Larger + non-f32 dtype: exercises the same single-DMA path with no
    # tiling / sublane / lane-density special cases.
    x_bf16 = jax.random.normal(key, (64, 384, 1, 1), dtype=jnp.bfloat16)
    out_bf16 = jax.block_until_ready(squeeze_extractor(x_bf16))
    assert out_bf16.shape == (64, 384)
    assert jnp.array_equal(out_bf16, jnp.squeeze(x_bf16, axis=(2, 3)))

    print("KERNEL_OK")
</pallas_src>

<mosaic_0001>
module attributes {stable_mosaic.version = 11 : i64} {
  func.func @_squeeze_copy_kernel(%arg0: memref<2x4xf32, #tpu.memory_space<any>>, %arg1: memref<2x4xf32, #tpu.memory_space<any>>, %arg2: memref<!tpu.dma_semaphore, #tpu.memory_space<semaphore_mem>>) attributes {dimension_semantics = [], scalar_prefetch = 0 : i64, scratch_operands = 1 : i64, tpu.core_type = #tpu.core_type<tc>} {
    tpu.enqueue_dma source(%arg0 : memref<2x4xf32, #tpu.memory_space<any>>) target(%arg1 : memref<2x4xf32, #tpu.memory_space<any>>) target_semaphore(%arg2 : memref<!tpu.dma_semaphore, #tpu.memory_space<semaphore_mem>>)
    tpu.wait_dma2 semaphore(%arg2 : memref<!tpu.dma_semaphore, #tpu.memory_space<semaphore_mem>>) src(%arg0 : memref<2x4xf32, #tpu.memory_space<any>>) dst(%arg1 : memref<2x4xf32, #tpu.memory_space<any>>)
    return
  }
}

</mosaic_0001>

<llo_original>
// kernel: tpu_custom_call.1
$region0: #{tpu_custom_call.1}
  #allocation0 [shape = 'u32[]', space=smem, size = 0x4, offset = 0x4, fixed_abs, tag = 'smem constant byte address 0x4 - core index']
  #allocation1 [shape = 'u32[144,128]{1,0:T(1,128)}', space=vmem, size = 0x12000, scoped, tag = 'internal scratch']
  #allocation2 [shape = 's32[1]{0}', space=sflag, size = 0x4, scoped, tag = 'scratch operand']
  #allocation3 [shape = 's32[]', space=sflag, size = 0x4, offset = 0, fixed_abs, tag = 'sflag constant byte address 0x0 - dummy sync flag']
  #allocation4 [shape = 'u32[0]{0}', space=smem, size = 0, offset = 0, fixed_abs, tag = 'smem constant byte address 0x0 - null']
  %s0 = inlined_call_operand.hbm [shape: f32[2,4], index: 0, kind: input, shape index: {}]
  %s1 = inlined_call_operand.hbm [shape: f32[2,4], index: 1, kind: output, shape index: {}]
  %s2 = sld [smem:[#allocation0]]
  $region2: #{tpu_custom_call.1} parent=0
    _
  %s4 = ssub.s32 1, %s2
  %s5 = scalar_select 0, %s4, %s2
  %s7 = sshll.u32 1, 14
  %s8 = sxor.u32 4294967295, %s7
  %s11 = sshll.u32 3, 24
  %s12 = sxor.u32 4294967295, %s11
  %s13 = sand.u32 0, %s12
  %s15 = sor.u32 %s13, 0
  %18 = dma.general %s0, 32, %s1, [#allocation2], [#allocation3], [#allocation4], %s15, 0
  %s19 = smul.u32 2, 1
  %s20 = sshll.u32 %s19, 4
  %21 = dma.done [#allocation2], %s20
  %22 = vsyncmov [#allocation2]
  %s23 = vpop.sfrf %22
  %p24 = scmp.eq.s32.totalorder %s23, 0
  %p25 = pneg %p24
  %27 = shalt.err (%p25)

</llo_original>
